<compile_context>
chip_gen: v7x
topology: tpu7x:2x2x1
jax: 0.10.0
libtpu: 0.0.40
codegen_flags: <defaults>
</compile_context>

<pallas_src>
import functools
import math

import jax
import jax.numpy as jnp
from jax import lax
from jax.experimental import pallas as pl
from jax.experimental.pallas import tpu as pltpu


def _round_up(n, m):
    return ((n + m - 1) // m) * m


# ----------------------------------- Pallas kernel -------------------------------------

def state_transition_kernel(x_ref, w1_ref, b1_ref, w2_ref, b2_ref, w3_ref, b3_ref,
                            out_ref, *, n_steps):
    f32 = jnp.float32
    bf16 = jnp.bfloat16

    # Weights stay resident in VMEM across all grid steps / transition steps.
    w1 = w1_ref[...]            # bf16 (E_pad, H_pad)
    b1 = b1_ref[...]            # f32  (1, H_pad)
    w2 = w2_ref[...]            # bf16 (H_pad, H_pad)
    b2 = b2_ref[...]            # f32  (1, H_pad)
    w3 = w3_ref[...]            # bf16 (H_pad, E_pad)
    b3 = b3_ref[...]            # f32  (1, E_pad)

    z0 = x_ref[...].astype(f32)  # (Bt, E_pad)

    def body(_, z):
        # Cast only the matmul operands to bf16; keep elementwise math in f32.
        h = jnp.dot(z.astype(bf16), w1, preferred_element_type=f32) + b1
        h = jnp.maximum(h, 0.0)
        # TODO(synk): Dropout(p=0.25) omitted -- eval-mode forward only.
        h = jnp.dot(h.astype(bf16), w2, preferred_element_type=f32) + b2
        h = jnp.maximum(h, 0.0)
        z = jnp.dot(h.astype(bf16), w3, preferred_element_type=f32) + b3
        return z

    z = lax.fori_loop(0, n_steps, body, z0, unroll=True)
    out_ref[...] = z.astype(out_ref.dtype)


# ------------------------------------- wrapper ------------------------------------------

def state_transition_forward(z, params, n_steps, *, block_b=8):
    """z: (B, embed_dim) f32; params: dict of f32 PyTorch-layout-equivalent weights."""
    B, E = z.shape
    H = params["w1"].shape[1]

    f32, bf16 = jnp.float32, jnp.bfloat16
    E_pad = _round_up(max(E, 1), 128)
    H_pad = _round_up(max(H, 1), 128)
    B_pad = _round_up(max(B, 1), block_b)

    def pad2(a, rows, cols, dtype):
        a = a.astype(dtype)
        return jnp.pad(a, ((0, rows - a.shape[0]), (0, cols - a.shape[1])))

    x_p = pad2(z.astype(f32), B_pad, E_pad, f32)
    w1 = pad2(params["w1"], E_pad, H_pad, bf16)
    b1 = pad2(params["b1"].reshape(1, -1), 1, H_pad, f32)
    w2 = pad2(params["w2"], H_pad, H_pad, bf16)
    b2 = pad2(params["b2"].reshape(1, -1), 1, H_pad, f32)
    w3 = pad2(params["w3"], H_pad, E_pad, bf16)
    b3 = pad2(params["b3"].reshape(1, -1), 1, E_pad, f32)

    grid = (B_pad // block_b,)

    # Rough but honest cost / VMEM accounting.
    flops = 2 * n_steps * B_pad * (E_pad * H_pad + H_pad * H_pad + H_pad * E_pad)
    weight_bytes = (w1.nbytes + w2.nbytes + w3.nbytes
                    + b1.nbytes + b2.nbytes + b3.nbytes)
    bytes_accessed = int(weight_bytes + x_p.nbytes + B_pad * E_pad * 4)
    cost = pl.CostEstimate(flops=int(flops), transcendentals=0,
                           bytes_accessed=bytes_accessed)

    act_tile_bytes = block_b * (E_pad + H_pad) * 4
    vmem_bytes = int(min(max(2 * weight_bytes + 8 * act_tile_bytes + (1 << 20),
                             4 << 20),
                         48 << 20))

    kernel = functools.partial(state_transition_kernel, n_steps=n_steps)

    out = pl.pallas_call(
        kernel,
        out_shape=jax.ShapeDtypeStruct((B_pad, E_pad), jnp.float32),
        grid_spec=pltpu.PrefetchScalarGridSpec(
            num_scalar_prefetch=0,
            grid=grid,
            in_specs=[
                pl.BlockSpec((block_b, E_pad), lambda i: (i, 0)),   # activations stream
                pl.BlockSpec((E_pad, H_pad), lambda i: (0, 0)),     # weights resident
                pl.BlockSpec((1, H_pad), lambda i: (0, 0)),
                pl.BlockSpec((H_pad, H_pad), lambda i: (0, 0)),
                pl.BlockSpec((1, H_pad), lambda i: (0, 0)),
                pl.BlockSpec((H_pad, E_pad), lambda i: (0, 0)),
                pl.BlockSpec((1, E_pad), lambda i: (0, 0)),
            ],
            out_specs=pl.BlockSpec((block_b, E_pad), lambda i: (i, 0)),
        ),
        compiler_params=pltpu.CompilerParams(
            dimension_semantics=("parallel",),
            vmem_limit_bytes=vmem_bytes,
        ),
        cost_estimate=cost,
    )(x_p, w1, b1, w2, b2, w3, b3)

    return out[:B, :E]


# --------------------------------- param init & reference ------------------------------

def init_params(key, embed_dim, hidden_dim):
    keys = jax.random.split(key, 3)

    def lin(k, fan_in, fan_out):
        bound = 1.0 / math.sqrt(fan_in)
        kw, kb = jax.random.split(k)
        w = jax.random.uniform(kw, (fan_in, fan_out), jnp.float32, -bound, bound)
        b = jax.random.uniform(kb, (fan_out,), jnp.float32, -bound, bound)
        return w, b

    p = {}
    p["w1"], p["b1"] = lin(keys[0], embed_dim, hidden_dim)
    p["w2"], p["b2"] = lin(keys[1], hidden_dim, hidden_dim)
    p["w3"], p["b3"] = lin(keys[2], hidden_dim, embed_dim)
    return p


def ref_forward(z, p, n_steps):
    """Pure-JAX reference of the same (eval-mode, bf16-weight) forward pass."""
    bf16, f32 = jnp.bfloat16, jnp.float32

    def q(a):  # mirror the bf16 quantization applied to matmul operands
        return a.astype(bf16).astype(f32)

    w1, w2, w3 = q(p["w1"]), q(p["w2"]), q(p["w3"])
    b1, b2, b3 = p["b1"], p["b2"], p["b3"]
    z = z.astype(f32)
    for _ in range(n_steps):
        h = jnp.maximum(q(z) @ w1 + b1, 0.0)
        h = jnp.maximum(q(h) @ w2 + b2, 0.0)
        z = q(h) @ w3 + b3
    return z


# --------------------------------------- main -------------------------------------------

if __name__ == "__main__":
    EMBED_DIM, HIDDEN_DIM, B, N_STEPS = 32, 64, 8, 3

    key = jax.random.PRNGKey(0)
    kz, kp = jax.random.split(key)
    z = jax.random.normal(kz, (B, EMBED_DIM), jnp.float32)
    params = init_params(kp, EMBED_DIM, HIDDEN_DIM)

    out = state_transition_forward(z, params, N_STEPS)
    out = jax.block_until_ready(out)

    ref = ref_forward(z, params, N_STEPS)
    assert out.shape == (B, EMBED_DIM), out.shape
    assert jnp.allclose(out, ref, atol=1e-2, rtol=1e-2), \
        f"max abs err {jnp.max(jnp.abs(out - ref))}"
    print("KERNEL_OK")
</pallas_src>

<mosaic_0001>
module attributes {stable_mosaic.version = 11 : i64} {
  func.func @state_transition_kernel(%arg0: i32, %arg1: memref<8x128xf32, #tpu.memory_space<vmem>>, %arg2: memref<128x128xbf16, #tpu.memory_space<vmem>>, %arg3: memref<1x128xf32, #tpu.memory_space<vmem>>, %arg4: memref<128x128xbf16, #tpu.memory_space<vmem>>, %arg5: memref<1x128xf32, #tpu.memory_space<vmem>>, %arg6: memref<128x128xbf16, #tpu.memory_space<vmem>>, %arg7: memref<1x128xf32, #tpu.memory_space<vmem>>, %arg8: memref<8x128xf32, #tpu.memory_space<vmem>>) attributes {dimension_semantics = [#tpu.dimension_semantics<parallel>], iteration_bounds = array<i64: 1>, scalar_prefetch = 0 : i64, scratch_operands = 0 : i64, tpu.core_type = #tpu.core_type<tc>, window_params = [{transform_indices = @transform_0, window_bounds = array<i64: 8, 128>}, {pipeline_mode = #tpu.pipeline_mode<synchronous>, transform_indices = @transform_1, window_bounds = array<i64: 128, 128>}, {pipeline_mode = #tpu.pipeline_mode<synchronous>, transform_indices = @transform_2, window_bounds = array<i64: 1, 128>}, {pipeline_mode = #tpu.pipeline_mode<synchronous>, transform_indices = @transform_3, window_bounds = array<i64: 128, 128>}, {pipeline_mode = #tpu.pipeline_mode<synchronous>, transform_indices = @transform_4, window_bounds = array<i64: 1, 128>}, {pipeline_mode = #tpu.pipeline_mode<synchronous>, transform_indices = @transform_5, window_bounds = array<i64: 128, 128>}, {pipeline_mode = #tpu.pipeline_mode<synchronous>, transform_indices = @transform_6, window_bounds = array<i64: 1, 128>}, {transform_indices = @transform_7, window_bounds = array<i64: 8, 128>}]} {
    %c0 = arith.constant 0 : index
    %c0_0 = arith.constant 0 : index
    %0 = vector.load %arg2[%c0, %c0_0] : memref<128x128xbf16, #tpu.memory_space<vmem>>, vector<128x128xbf16>
    %c0_1 = arith.constant 0 : index
    %c0_2 = arith.constant 0 : index
    %1 = vector.load %arg3[%c0_1, %c0_2] : memref<1x128xf32, #tpu.memory_space<vmem>>, vector<1x128xf32>
    %c0_3 = arith.constant 0 : index
    %c0_4 = arith.constant 0 : index
    %2 = vector.load %arg4[%c0_3, %c0_4] : memref<128x128xbf16, #tpu.memory_space<vmem>>, vector<128x128xbf16>
    %c0_5 = arith.constant 0 : index
    %c0_6 = arith.constant 0 : index
    %3 = vector.load %arg5[%c0_5, %c0_6] : memref<1x128xf32, #tpu.memory_space<vmem>>, vector<1x128xf32>
    %c0_7 = arith.constant 0 : index
    %c0_8 = arith.constant 0 : index
    %4 = vector.load %arg6[%c0_7, %c0_8] : memref<128x128xbf16, #tpu.memory_space<vmem>>, vector<128x128xbf16>
    %c0_9 = arith.constant 0 : index
    %c0_10 = arith.constant 0 : index
    %5 = vector.load %arg7[%c0_9, %c0_10] : memref<1x128xf32, #tpu.memory_space<vmem>>, vector<1x128xf32>
    %c0_11 = arith.constant 0 : index
    %c0_12 = arith.constant 0 : index
    %6 = vector.load %arg1[%c0_11, %c0_12] : memref<8x128xf32, #tpu.memory_space<vmem>>, vector<8x128xf32>
    %c0_i32 = arith.constant 0 : i32
    %7 = arith.truncf %6 : vector<8x128xf32> to vector<8x128xbf16>
    %cst = arith.constant dense<0.000000e+00> : vector<8x128xf32>
    %8 = tpu.matmul %7, %0, %cst {dimension_numbers = #tpu.dot_dimension_numbers<[1], [0], [0], [1], [0, 0, 1, 1], [], []>} : vector<8x128xbf16>, vector<128x128xbf16>, vector<8x128xf32> -> vector<8x128xf32>
    %9 = vector.broadcast %1 : vector<1x128xf32> to vector<8x128xf32>
    %10 = arith.addf %8, %9 : vector<8x128xf32>
    %cst_13 = arith.constant 0.000000e+00 : f32
    %11 = vector.broadcast %cst_13 : f32 to vector<8x128xf32>
    %12 = arith.maximumf %10, %11 : vector<8x128xf32>
    %13 = arith.truncf %12 : vector<8x128xf32> to vector<8x128xbf16>
    %cst_14 = arith.constant dense<0.000000e+00> : vector<8x128xf32>
    %14 = tpu.matmul %13, %2, %cst_14 {dimension_numbers = #tpu.dot_dimension_numbers<[1], [0], [0], [1], [0, 0, 1, 1], [], []>} : vector<8x128xbf16>, vector<128x128xbf16>, vector<8x128xf32> -> vector<8x128xf32>
    %15 = vector.broadcast %3 : vector<1x128xf32> to vector<8x128xf32>
    %16 = arith.addf %14, %15 : vector<8x128xf32>
    %cst_15 = arith.constant 0.000000e+00 : f32
    %17 = vector.broadcast %cst_15 : f32 to vector<8x128xf32>
    %18 = arith.maximumf %16, %17 : vector<8x128xf32>
    %19 = arith.truncf %18 : vector<8x128xf32> to vector<8x128xbf16>
    %cst_16 = arith.constant dense<0.000000e+00> : vector<8x128xf32>
    %20 = tpu.matmul %19, %4, %cst_16 {dimension_numbers = #tpu.dot_dimension_numbers<[1], [0], [0], [1], [0, 0, 1, 1], [], []>} : vector<8x128xbf16>, vector<128x128xbf16>, vector<8x128xf32> -> vector<8x128xf32>
    %21 = vector.broadcast %5 : vector<1x128xf32> to vector<8x128xf32>
    %22 = arith.addf %20, %21 : vector<8x128xf32>
    %c1_i32 = arith.constant 1 : i32
    %23 = arith.truncf %22 : vector<8x128xf32> to vector<8x128xbf16>
    %cst_17 = arith.constant dense<0.000000e+00> : vector<8x128xf32>
    %24 = tpu.matmul %23, %0, %cst_17 {dimension_numbers = #tpu.dot_dimension_numbers<[1], [0], [0], [1], [0, 0, 1, 1], [], []>} : vector<8x128xbf16>, vector<128x128xbf16>, vector<8x128xf32> -> vector<8x128xf32>
    %25 = vector.broadcast %1 : vector<1x128xf32> to vector<8x128xf32>
    %26 = arith.addf %24, %25 : vector<8x128xf32>
    %cst_18 = arith.constant 0.000000e+00 : f32
    %27 = vector.broadcast %cst_18 : f32 to vector<8x128xf32>
    %28 = arith.maximumf %26, %27 : vector<8x128xf32>
    %29 = arith.truncf %28 : vector<8x128xf32> to vector<8x128xbf16>
    %cst_19 = arith.constant dense<0.000000e+00> : vector<8x128xf32>
    %30 = tpu.matmul %29, %2, %cst_19 {dimension_numbers = #tpu.dot_dimension_numbers<[1], [0], [0], [1], [0, 0, 1, 1], [], []>} : vector<8x128xbf16>, vector<128x128xbf16>, vector<8x128xf32> -> vector<8x128xf32>
    %31 = vector.broadcast %3 : vector<1x128xf32> to vector<8x128xf32>
    %32 = arith.addf %30, %31 : vector<8x128xf32>
    %cst_20 = arith.constant 0.000000e+00 : f32
    %33 = vector.broadcast %cst_20 : f32 to vector<8x128xf32>
    %34 = arith.maximumf %32, %33 : vector<8x128xf32>
    %35 = arith.truncf %34 : vector<8x128xf32> to vector<8x128xbf16>
    %cst_21 = arith.constant dense<0.000000e+00> : vector<8x128xf32>
    %36 = tpu.matmul %35, %4, %cst_21 {dimension_numbers = #tpu.dot_dimension_numbers<[1], [0], [0], [1], [0, 0, 1, 1], [], []>} : vector<8x128xbf16>, vector<128x128xbf16>, vector<8x128xf32> -> vector<8x128xf32>
    %37 = vector.broadcast %5 : vector<1x128xf32> to vector<8x128xf32>
    %38 = arith.addf %36, %37 : vector<8x128xf32>
    %c2_i32 = arith.constant 2 : i32
    %39 = arith.truncf %38 : vector<8x128xf32> to vector<8x128xbf16>
    %cst_22 = arith.constant dense<0.000000e+00> : vector<8x128xf32>
    %40 = tpu.matmul %39, %0, %cst_22 {dimension_numbers = #tpu.dot_dimension_numbers<[1], [0], [0], [1], [0, 0, 1, 1], [], []>} : vector<8x128xbf16>, vector<128x128xbf16>, vector<8x128xf32> -> vector<8x128xf32>
    %41 = vector.broadcast %1 : vector<1x128xf32> to vector<8x128xf32>
    %42 = arith.addf %40, %41 : vector<8x128xf32>
    %cst_23 = arith.constant 0.000000e+00 : f32
    %43 = vector.broadcast %cst_23 : f32 to vector<8x128xf32>
    %44 = arith.maximumf %42, %43 : vector<8x128xf32>
    %45 = arith.truncf %44 : vector<8x128xf32> to vector<8x128xbf16>
    %cst_24 = arith.constant dense<0.000000e+00> : vector<8x128xf32>
    %46 = tpu.matmul %45, %2, %cst_24 {dimension_numbers = #tpu.dot_dimension_numbers<[1], [0], [0], [1], [0, 0, 1, 1], [], []>} : vector<8x128xbf16>, vector<128x128xbf16>, vector<8x128xf32> -> vector<8x128xf32>
    %47 = vector.broadcast %3 : vector<1x128xf32> to vector<8x128xf32>
    %48 = arith.addf %46, %47 : vector<8x128xf32>
    %cst_25 = arith.constant 0.000000e+00 : f32
    %49 = vector.broadcast %cst_25 : f32 to vector<8x128xf32>
    %50 = arith.maximumf %48, %49 : vector<8x128xf32>
    %51 = arith.truncf %50 : vector<8x128xf32> to vector<8x128xbf16>
    %cst_26 = arith.constant dense<0.000000e+00> : vector<8x128xf32>
    %52 = tpu.matmul %51, %4, %cst_26 {dimension_numbers = #tpu.dot_dimension_numbers<[1], [0], [0], [1], [0, 0, 1, 1], [], []>} : vector<8x128xbf16>, vector<128x128xbf16>, vector<8x128xf32> -> vector<8x128xf32>
    %53 = vector.broadcast %5 : vector<1x128xf32> to vector<8x128xf32>
    %54 = arith.addf %52, %53 : vector<8x128xf32>
    %c0_27 = arith.constant 0 : index
    %c0_28 = arith.constant 0 : index
    %55 = vector.load %arg8[%c0_27, %c0_28] : memref<8x128xf32, #tpu.memory_space<vmem>>, vector<8x128xf32>
    tpu.vector_store %arg8[%c0_27, %c0_28], %54 {strides = array<i32>} : memref<8x128xf32, #tpu.memory_space<vmem>>, vector<8x128xf32>,
    return
  }
  func.func @transform_0(%arg0: i32) -> (i32, i32) {
    %c0_i32 = arith.constant 0 : i32
    %c0_i32_0 = arith.constant 0 : i32
    return %arg0, %c0_i32 : i32, i32
  }
  func.func @transform_1(%arg0: i32) -> (i32, i32) {
    %c0_i32 = arith.constant 0 : i32
    %c0_i32_0 = arith.constant 0 : i32
    %c0_i32_1 = arith.constant 0 : i32
    return %c0_i32, %c0_i32_0 : i32, i32
  }
  func.func @transform_2(%arg0: i32) -> (i32, i32) {
    %c0_i32 = arith.constant 0 : i32
    %c0_i32_0 = arith.constant 0 : i32
    %c0_i32_1 = arith.constant 0 : i32
    return %c0_i32, %c0_i32_0 : i32, i32
  }
  func.func @transform_3(%arg0: i32) -> (i32, i32) {
    %c0_i32 = arith.constant 0 : i32
    %c0_i32_0 = arith.constant 0 : i32
    %c0_i32_1 = arith.constant 0 : i32
    return %c0_i32, %c0_i32_0 : i32, i32
  }
  func.func @transform_4(%arg0: i32) -> (i32, i32) {
    %c0_i32 = arith.constant 0 : i32
    %c0_i32_0 = arith.constant 0 : i32
    %c0_i32_1 = arith.constant 0 : i32
    return %c0_i32, %c0_i32_0 : i32, i32
  }
  func.func @transform_5(%arg0: i32) -> (i32, i32) {
    %c0_i32 = arith.constant 0 : i32
    %c0_i32_0 = arith.constant 0 : i32
    %c0_i32_1 = arith.constant 0 : i32
    return %c0_i32, %c0_i32_0 : i32, i32
  }
  func.func @transform_6(%arg0: i32) -> (i32, i32) {
    %c0_i32 = arith.constant 0 : i32
    %c0_i32_0 = arith.constant 0 : i32
    %c0_i32_1 = arith.constant 0 : i32
    return %c0_i32, %c0_i32_0 : i32, i32
  }
  func.func @transform_7(%arg0: i32) -> (i32, i32) {
    %c0_i32 = arith.constant 0 : i32
    %c0_i32_0 = arith.constant 0 : i32
    return %arg0, %c0_i32 : i32, i32
  }
}

</mosaic_0001>

<llo_original>
// kernel: tpu_custom_call.1
$region0: #{tpu_custom_call.1}
  #allocation0 [shape = 'u32[]', space=smem, size = 0x4, offset = 0x4, fixed_abs, tag = 'smem constant byte address 0x4 - core index']
  #allocation1 [shape = 'u32[144,128]{1,0:T(1,128)}', space=vmem, size = 0x12000, scoped, tag = 'internal scratch']
  %s0 = inlined_call_operand.hbm [shape: f32[8,128], index: 0, kind: input, shape index: {}]
  %s1 = inlined_call_operand.hbm [shape: bf16[128,128], index: 1, kind: input, shape index: {}]
  %s2 = inlined_call_operand.vmem [shape: f32[1,128], index: 2, kind: input, shape index: {}]
  %s3 = inlined_call_operand.hbm [shape: bf16[128,128], index: 3, kind: input, shape index: {}]
  %s4 = inlined_call_operand.vmem [shape: f32[1,128], index: 4, kind: input, shape index: {}]
  %s5 = inlined_call_operand.hbm [shape: bf16[128,128], index: 5, kind: input, shape index: {}]
  %s6 = inlined_call_operand.vmem [shape: f32[1,128], index: 6, kind: input, shape index: {}]
  %s7 = inlined_call_operand.hbm [shape: f32[8,128], index: 7, kind: output, shape index: {}]
  %s8 = sld [smem:[#allocation0]]
  $region54: #{tpu_custom_call.1} parent=0
    _
  %s10 = ssub.s32 1, %s8
  %s11 = scalar_select 0, %s10, %s8
  $region1: #{tpu_custom_call.1} parent=0
    #allocation2 [shape = 'u8[4096]{0}', space=vmem, size = 0x1000, scoped, tag = 'input window, operand 0, single buffered']
    #allocation3 [shape = 's32[1]{0}', space=sflag, size = 0x4, scoped, tag = 'scoped memory for tpu_custom_call.1']
    #allocation4 [shape = 's32[1]{0}', space=sflag, size = 0x4, scoped, tag = 'scoped memory for tpu_custom_call.1']
    #allocation5 [shape = 'u8[32768]{0}', space=vmem, size = 0x8000, scoped, tag = 'input window, operand 1, single buffered']
    #allocation6 [shape = 's32[1]{0}', space=sflag, size = 0x4, scoped, tag = 'scoped memory for tpu_custom_call.1']
    #allocation7 [shape = 'u8[32768]{0}', space=vmem, size = 0x8000, scoped, tag = 'input window, operand 3, single buffered']
    #allocation8 [shape = 'u8[32768]{0}', space=vmem, size = 0x8000, scoped, tag = 'input window, operand 5, single buffered']
    #allocation9 [shape = 's32[1]{0}', space=sflag, size = 0x4, scoped, tag = 'scoped memory for tpu_custom_call.1']
    #allocation10 [shape = 'u8[4096]{0}', space=vmem, size = 0x1000, scoped, tag = 'output window, operand 0, single buffered']
    %12 = vsyncpa [#allocation3], 0
    %13 = vsyncpa [#allocation6], 0
    %14 = vsyncpa [#allocation9], 0
    %15 = vsyncpa [#allocation4], 0
    // Predicated region
    $region2: #{tpu_custom_call.1} parent=1 // pred_check
      _
    $region3: #{tpu_custom_call.1} parent=1 // pred_check_branch
      %17 = sbr.rel (0) target = $region5
    $region4: #{tpu_custom_call.1} parent=1 // pred_region
      %s19 = ssub.s32 128, 128
      %20 = vsyncadd [#allocation3], %s19
      %s22 = sshll.u32 [#allocation2], 4
      %s23 = int_to_ptr.vmem [resolvable:$true] %s22
      %25 = dma.hbm_to_vmem [thread:$0]  %s0, 128, %s23, [#allocation3]
    $region5: #{tpu_custom_call.1} parent=1 // pred_fallthru
      _
    // Predicated region
    $region6: #{tpu_custom_call.1} parent=1 // pred_check
      _
    $region7: #{tpu_custom_call.1} parent=1 // pred_check_branch
      %27 = sbr.rel (0) target = $region9
    $region8: #{tpu_custom_call.1} parent=1 // pred_region
      %s29 = ssub.s32 1024, 1024
      %30 = vsyncadd [#allocation6], %s29
      %s31 = sshll.u32 [#allocation5], 4
      %s32 = int_to_ptr.vmem [resolvable:$true] %s31
      %37 = dma.hbm_to_vmem [thread:$0]  %s1, 1024, %s32, [#allocation6], 64, 64, 4
    $region9: #{tpu_custom_call.1} parent=1 // pred_fallthru
      _
    // Predicated region
    $region10: #{tpu_custom_call.1} parent=1 // pred_check
      _
    $region11: #{tpu_custom_call.1} parent=1 // pred_check_branch
      %39 = sbr.rel (0) target = $region13
    $region12: #{tpu_custom_call.1} parent=1 // pred_region
      _
    $region13: #{tpu_custom_call.1} parent=1 // pred_fallthru
      _
    // Predicated region
    $region14: #{tpu_custom_call.1} parent=1 // pred_check
      _
    $region15: #{tpu_custom_call.1} parent=1 // pred_check_branch
      %41 = sbr.rel (0) target = $region17
    $region16: #{tpu_custom_call.1} parent=1 // pred_region
      %s43 = ssub.s32 1024, 1024
      %44 = vsyncadd [#allocation6], %s43
      %s45 = sshll.u32 [#allocation7], 4
      %s46 = int_to_ptr.vmem [resolvable:$true] %s45
      %51 = dma.hbm_to_vmem [thread:$0]  %s3, 1024, %s46, [#allocation6], 64, 64, 4
    $region17: #{tpu_custom_call.1} parent=1 // pred_fallthru
      _
    // Predicated region
    $region18: #{tpu_custom_call.1} parent=1 // pred_check
      _
    $region19: #{tpu_custom_call.1} parent=1 // pred_check_branch
      %53 = sbr.rel (0) target = $region21
    $region20: #{tpu_custom_call.1} parent=1 // pred_region
      _
    $region21: #{tpu_custom_call.1} parent=1 // pred_fallthru
      _
    // Predicated region
    $region22: #{tpu_custom_call.1} parent=1 // pred_check
      _
    $region23: #{tpu_custom_call.1} parent=1 // pred_check_branch
      %55 = sbr.rel (0) target = $region25
    $region24: #{tpu_custom_call.1} parent=1 // pred_region
      %s57 = ssub.s32 1024, 1024
      %58 = vsyncadd [#allocation9], %s57
      %s59 = sshll.u32 [#allocation8], 4
      %s60 = int_to_ptr.vmem [resolvable:$true] %s59
      %65 = dma.hbm_to_vmem [thread:$0]  %s5, 1024, %s60, [#allocation9], 64, 64, 4
    $region25: #{tpu_custom_call.1} parent=1 // pred_fallthru
      _
    // Predicated region
    $region26: #{tpu_custom_call.1} parent=1 // pred_check
      _
    $region27: #{tpu_custom_call.1} parent=1 // pred_check_branch
      %67 = sbr.rel (0) target = $region29
    $region28: #{tpu_custom_call.1} parent=1 // pred_region
      _
    $region29: #{tpu_custom_call.1} parent=1 // pred_fallthru
      _
    // Predicated region
    $region30: #{tpu_custom_call.1} parent=1 // pred_check
      _
    $region31: #{tpu_custom_call.1} parent=1 // pred_check_branch
      %69 = sbr.rel (0) target = $region33
    $region32: #{tpu_custom_call.1} parent=1 // pred_region
      %70 = dma.done [#allocation3], 128
    $region33: #{tpu_custom_call.1} parent=1 // pred_fallthru
      _
    // Predicated region
    $region34: #{tpu_custom_call.1} parent=1 // pred_check
      _
    $region35: #{tpu_custom_call.1} parent=1 // pred_check_branch
      %72 = sbr.rel (0) target = $region37
    $region36: #{tpu_custom_call.1} parent=1 // pred_region
      %73 = dma.done [#allocation6], 1024
    $region37: #{tpu_custom_call.1} parent=1 // pred_fallthru
      _
    // Predicated region
    $region38: #{tpu_custom_call.1} parent=1 // pred_check
      _
    $region39: #{tpu_custom_call.1} parent=1 // pred_check_branch
      %75 = sbr.rel (0) target = $region41
    $region40: #{tpu_custom_call.1} parent=1 // pred_region
      %76 = dma.done [#allocation6], 1024
    $region41: #{tpu_custom_call.1} parent=1 // pred_fallthru
      _
    // Predicated region
    $region42: #{tpu_custom_call.1} parent=1 // pred_check
      _
    $region43: #{tpu_custom_call.1} parent=1 // pred_check_branch
      %78 = sbr.rel (0) target = $region45
    $region44: #{tpu_custom_call.1} parent=1 // pred_region
      %79 = dma.done [#allocation9], 1024
    $region45: #{tpu_custom_call.1} parent=1 // pred_fallthru
      _
    %v81 = vld [vmem:[#allocation5] sm:$0xf]
    %v82 = vld [vmem:[#allocation5 + $0x4] sm:$0xf]
    %v83 = vld [vmem:[#allocation5 + $0x8] sm:$0xf]
    %v84 = vld [vmem:[#allocation5 + $0xc] sm:$0xf]
    %v85 = vld [vmem:[#allocation5 + $0x10] sm:$0xf]
    %v86 = vld [vmem:[#allocation5 + $0x14] sm:$0xf]
    %v87 = vld [vmem:[#allocation5 + $0x18] sm:$0xf]
    %v88 = vld [vmem:[#allocation5 + $0x1c] sm:$0xf]
    %v89 = vld [vmem:[#allocation5 + $0x20] sm:$0xf]
    %v90 = vld [vmem:[#allocation5 + $0x24] sm:$0xf]
    %v91 = vld [vmem:[#allocation5 + $0x28] sm:$0xf]
    %v92 = vld [vmem:[#allocation5 + $0x2c] sm:$0xf]
    %v93 = vld [vmem:[#allocation5 + $0x30] sm:$0xf]
    %v94 = vld [vmem:[#allocation5 + $0x34] sm:$0xf]
    %v95 = vld [vmem:[#allocation5 + $0x38] sm:$0xf]
    %v96 = vld [vmem:[#allocation5 + $0x3c] sm:$0xf]
    %v97 = vld [vmem:[%s2] sm:$0x1]
    %v98 = vld [vmem:[#allocation7] sm:$0xf]
    %v99 = vld [vmem:[#allocation7 + $0x4] sm:$0xf]
    %v100 = vld [vmem:[#allocation7 + $0x8] sm:$0xf]
    %v101 = vld [vmem:[#allocation7 + $0xc] sm:$0xf]
    %v102 = vld [vmem:[#allocation7 + $0x10] sm:$0xf]
    %v103 = vld [vmem:[#allocation7 + $0x14] sm:$0xf]
    %v104 = vld [vmem:[#allocation7 + $0x18] sm:$0xf]
    %v105 = vld [vmem:[#allocation7 + $0x1c] sm:$0xf]
    %v106 = vld [vmem:[#allocation7 + $0x20] sm:$0xf]
    %v107 = vld [vmem:[#allocation7 + $0x24] sm:$0xf]
    %v108 = vld [vmem:[#allocation7 + $0x28] sm:$0xf]
    %v109 = vld [vmem:[#allocation7 + $0x2c] sm:$0xf]
    %v110 = vld [vmem:[#allocation7 + $0x30] sm:$0xf]
    %v111 = vld [vmem:[#allocation7 + $0x34] sm:$0xf]
    %v112 = vld [vmem:[#allocation7 + $0x38] sm:$0xf]
    %v113 = vld [vmem:[#allocation7 + $0x3c] sm:$0xf]
    %v114 = vld [vmem:[%s4] sm:$0x1]
    %v115 = vld [vmem:[#allocation8] sm:$0xf]
    %v116 = vld [vmem:[#allocation8 + $0x4] sm:$0xf]
    %v117 = vld [vmem:[#allocation8 + $0x8] sm:$0xf]
    %v118 = vld [vmem:[#allocation8 + $0xc] sm:$0xf]
    %v119 = vld [vmem:[#allocation8 + $0x10] sm:$0xf]
    %v120 = vld [vmem:[#allocation8 + $0x14] sm:$0xf]
    %v121 = vld [vmem:[#allocation8 + $0x18] sm:$0xf]
    %v122 = vld [vmem:[#allocation8 + $0x1c] sm:$0xf]
    %v123 = vld [vmem:[#allocation8 + $0x20] sm:$0xf]
    %v124 = vld [vmem:[#allocation8 + $0x24] sm:$0xf]
    %v125 = vld [vmem:[#allocation8 + $0x28] sm:$0xf]
    %v126 = vld [vmem:[#allocation8 + $0x2c] sm:$0xf]
    %v127 = vld [vmem:[#allocation8 + $0x30] sm:$0xf]
    %v128 = vld [vmem:[#allocation8 + $0x34] sm:$0xf]
    %v129 = vld [vmem:[#allocation8 + $0x38] sm:$0xf]
    %v130 = vld [vmem:[#allocation8 + $0x3c] sm:$0xf]
    %v131 = vld [vmem:[%s6] sm:$0x1]
    %v132 = vld [vmem:[#allocation2] sm:$0xff]
    %v133 = vpack.c.bf16 %v132, %v132
    %v135 = vlaneseq
    %v136 = vshrl.u32 %v135, 7
    %v137 = vsub.s32 0, %v136
    %v138 = vrot.slane %v97, %v137
    %v156 = vunpack.c.l.b16 %v81
    %v157 = vunpack.c.l.b16 %v82
    %v158 = vunpack.c.l.b16 %v83
    %v159 = vunpack.c.l.b16 %v84
    %v160 = vunpack.c.l.b16 %v85
    %v161 = vunpack.c.l.b16 %v86
    %v162 = vunpack.c.l.b16 %v87
    %v163 = vunpack.c.l.b16 %v88
    %v164 = vunpack.c.l.b16 %v89
    %v165 = vunpack.c.l.b16 %v90
    %v166 = vunpack.c.l.b16 %v91
    %v167 = vunpack.c.l.b16 %v92
    %v168 = vunpack.c.l.b16 %v93
    %v169 = vunpack.c.l.b16 %v94
    %v170 = vunpack.c.l.b16 %v95
    %v171 = vunpack.c.l.b16 %v96
    %v172 = vpack.c.b16 %v157, %v156
    %v173 = vpack.c.b16 %v159, %v158
    %v174 = vpack.c.b16 %v161, %v160
    %v175 = vpack.c.b16 %v163, %v162
    %v176 = vpack.c.b16 %v165, %v164
    %v177 = vpack.c.b16 %v167, %v166
    %v178 = vpack.c.b16 %v169, %v168
    %v179 = vpack.c.b16 %v171, %v170
    %188 = vmatprep.subr.bf16.mxu0 0
    %189 = vmatpush1.bf16.msra.mxu0 %v172
    %190 = vmatprep.subr.bf16.mxu0 0
    %191 = vmatpush1.bf16.msra.mxu0 %v173
    %192 = vmatprep.subr.bf16.mxu0 0
    %193 = vmatpush1.bf16.msra.mxu0 %v174
    %194 = vmatprep.subr.bf16.mxu0 0
    %195 = vmatpush1.bf16.msra.mxu0 %v175
    %196 = vmatprep.subr.bf16.mxu0 0
    %197 = vmatpush1.bf16.msra.mxu0 %v176
    %198 = vmatprep.subr.bf16.mxu0 0
    %199 = vmatpush1.bf16.msra.mxu0 %v177
    %200 = vmatprep.subr.bf16.mxu0 0
    %201 = vmatpush1.bf16.msra.mxu0 %v178
    %202 = vmatprep.subr.bf16.mxu0 0
    %203 = vmatpush1.bf16.msra.mxu0 %v179
    %204 = vmatprep.subr.bf16.mxu0 0
    %205 = vmatpush1.bf16.msra.mxu0 0
    %206 = vmatprep.subr.bf16.mxu0 0
    %207 = vmatpush1.bf16.msra.mxu0 0
    %208 = vmatprep.subr.bf16.mxu0 0
    %209 = vmatpush1.bf16.msra.mxu0 0
    %210 = vmatprep.subr.bf16.mxu0 0
    %211 = vmatpush1.bf16.msra.mxu0 0
    %212 = vmatprep.subr.bf16.mxu0 0
    %213 = vmatpush1.bf16.msra.mxu0 0
    %214 = vmatprep.subr.bf16.mxu0 0
    %215 = vmatpush1.bf16.msra.mxu0 0
    %216 = vmatprep.subr.bf16.mxu0 0
    %217 = vmatpush1.bf16.msra.mxu0 0
    %218 = vmatprep.subr.bf16.mxu0 0
    %219 = vmatpush1.bf16.msra.mxu0 0
    %220 = vmatprep.mubr.bf16.mxu0 0
    %221 = vmatmul.mubr.bf16.gmra.mrb[0].mxu0 %v133
    %v222 = vpop.f32.mrb[0].mxu0
    %v223 = vadd.f32 %v138, %v222
    %v224 = vpop.f32.mrb[0].mxu0
    %v225 = vpop.f32.mrb[0].mxu0
    %v226 = vpop.f32.mrb[0].mxu0
    %227 = vdwg.mxu0
    %v228 = vmax.f32 %v223, 0.0
    %v229 = vpack.c.bf16 %v228, %v228
    %v231 = vlaneseq
    %v232 = vshrl.u32 %v231, 7
    %v233 = vsub.s32 0, %v232
    %v234 = vrot.slane %v114, %v233
    %v252 = vunpack.c.l.b16 %v98
    %v253 = vunpack.c.l.b16 %v99
    %v254 = vunpack.c.l.b16 %v100
    %v255 = vunpack.c.l.b16 %v101
    %v256 = vunpack.c.l.b16 %v102
    %v257 = vunpack.c.l.b16 %v103
    %v258 = vunpack.c.l.b16 %v104
    %v259 = vunpack.c.l.b16 %v105
    %v260 = vunpack.c.l.b16 %v106
    %v261 = vunpack.c.l.b16 %v107
    %v262 = vunpack.c.l.b16 %v108
    %v263 = vunpack.c.l.b16 %v109
    %v264 = vunpack.c.l.b16 %v110
    %v265 = vunpack.c.l.b16 %v111
    %v266 = vunpack.c.l.b16 %v112
    %v267 = vunpack.c.l.b16 %v113
    %v268 = vpack.c.b16 %v253, %v252
    %v269 = vpack.c.b16 %v255, %v254
    %v270 = vpack.c.b16 %v257, %v256
    %v271 = vpack.c.b16 %v259, %v258
    %v272 = vpack.c.b16 %v261, %v260
    %v273 = vpack.c.b16 %v263, %v262
    %v274 = vpack.c.b16 %v265, %v264
    %v275 = vpack.c.b16 %v267, %v266
    %284 = vmatprep.subr.bf16.mxu0 0
    %285 = vmatpush1.bf16.msra.mxu0 %v268
    %286 = vmatprep.subr.bf16.mxu0 0
    %287 = vmatpush1.bf16.msra.mxu0 %v269
    %288 = vmatprep.subr.bf16.mxu0 0
    %289 = vmatpush1.bf16.msra.mxu0 %v270
    %290 = vmatprep.subr.bf16.mxu0 0
    %291 = vmatpush1.bf16.msra.mxu0 %v271
    %292 = vmatprep.subr.bf16.mxu0 0
    %293 = vmatpush1.bf16.msra.mxu0 %v272
    %294 = vmatprep.subr.bf16.mxu0 0
    %295 = vmatpush1.bf16.msra.mxu0 %v273
    %296 = vmatprep.subr.bf16.mxu0 0
    %297 = vmatpush1.bf16.msra.mxu0 %v274
    %298 = vmatprep.subr.bf16.mxu0 0
    %299 = vmatpush1.bf16.msra.mxu0 %v275
    %300 = vmatprep.subr.bf16.mxu0 0
    %301 = vmatpush1.bf16.msra.mxu0 0
    %302 = vmatprep.subr.bf16.mxu0 0
    %303 = vmatpush1.bf16.msra.mxu0 0
    %304 = vmatprep.subr.bf16.mxu0 0
    %305 = vmatpush1.bf16.msra.mxu0 0
    %306 = vmatprep.subr.bf16.mxu0 0
    %307 = vmatpush1.bf16.msra.mxu0 0
    %308 = vmatprep.subr.bf16.mxu0 0
    %309 = vmatpush1.bf16.msra.mxu0 0
    %310 = vmatprep.subr.bf16.mxu0 0
    %311 = vmatpush1.bf16.msra.mxu0 0
    %312 = vmatprep.subr.bf16.mxu0 0
    %313 = vmatpush1.bf16.msra.mxu0 0
    %314 = vmatprep.subr.bf16.mxu0 0
    %315 = vmatpush1.bf16.msra.mxu0 0
    %316 = vmatprep.mubr.bf16.mxu0 0
    %317 = vmatmul.mubr.bf16.gmra.mrb[0].mxu0 %v229
    %v318 = vpop.f32.mrb[0].mxu0
    %v319 = vadd.f32 %v234, %v318
    %v320 = vpop.f32.mrb[0].mxu0
    %v321 = vpop.f32.mrb[0].mxu0
    %v322 = vpop.f32.mrb[0].mxu0
    %323 = vdwg.mxu0
    %v324 = vmax.f32 %v319, 0.0
    %v325 = vpack.c.bf16 %v324, %v324
    %v327 = vlaneseq
    %v328 = vshrl.u32 %v327, 7
    %v329 = vsub.s32 0, %v328
    %v330 = vrot.slane %v131, %v329
    %v348 = vunpack.c.l.b16 %v115
    %v349 = vunpack.c.l.b16 %v116
    %v350 = vunpack.c.l.b16 %v117
    %v351 = vunpack.c.l.b16 %v118
    %v352 = vunpack.c.l.b16 %v119
    %v353 = vunpack.c.l.b16 %v120
    %v354 = vunpack.c.l.b16 %v121
    %v355 = vunpack.c.l.b16 %v122
    %v356 = vunpack.c.l.b16 %v123
    %v357 = vunpack.c.l.b16 %v124
    %v358 = vunpack.c.l.b16 %v125
    %v359 = vunpack.c.l.b16 %v126
    %v360 = vunpack.c.l.b16 %v127
    %v361 = vunpack.c.l.b16 %v128
    %v362 = vunpack.c.l.b16 %v129
    %v363 = vunpack.c.l.b16 %v130
    %v364 = vpack.c.b16 %v349, %v348
    %v365 = vpack.c.b16 %v351, %v350
    %v366 = vpack.c.b16 %v353, %v352
    %v367 = vpack.c.b16 %v355, %v354
    %v368 = vpack.c.b16 %v357, %v356
    %v369 = vpack.c.b16 %v359, %v358
    %v370 = vpack.c.b16 %v361, %v360
    %v371 = vpack.c.b16 %v363, %v362
    %380 = vmatprep.subr.bf16.mxu0 0
    %381 = vmatpush1.bf16.msra.mxu0 %v364
    %382 = vmatprep.subr.bf16.mxu0 0
    %383 = vmatpush1.bf16.msra.mxu0 %v365
    %384 = vmatprep.subr.bf16.mxu0 0
    %385 = vmatpush1.bf16.msra.mxu0 %v366
    %386 = vmatprep.subr.bf16.mxu0 0
    %387 = vmatpush1.bf16.msra.mxu0 %v367
    %388 = vmatprep.subr.bf16.mxu0 0
    %389 = vmatpush1.bf16.msra.mxu0 %v368
    %390 = vmatprep.subr.bf16.mxu0 0
    %391 = vmatpush1.bf16.msra.mxu0 %v369
    %392 = vmatprep.subr.bf16.mxu0 0
    %393 = vmatpush1.bf16.msra.mxu0 %v370
    %394 = vmatprep.subr.bf16.mxu0 0
    %395 = vmatpush1.bf16.msra.mxu0 %v371
    %396 = vmatprep.subr.bf16.mxu0 0
    %397 = vmatpush1.bf16.msra.mxu0 0
    %398 = vmatprep.subr.bf16.mxu0 0
    %399 = vmatpush1.bf16.msra.mxu0 0
    %400 = vmatprep.subr.bf16.mxu0 0
    %401 = vmatpush1.bf16.msra.mxu0 0
    %402 = vmatprep.subr.bf16.mxu0 0
    %403 = vmatpush1.bf16.msra.mxu0 0
    %404 = vmatprep.subr.bf16.mxu0 0
    %405 = vmatpush1.bf16.msra.mxu0 0
    %406 = vmatprep.subr.bf16.mxu0 0
    %407 = vmatpush1.bf16.msra.mxu0 0
    %408 = vmatprep.subr.bf16.mxu0 0
    %409 = vmatpush1.bf16.msra.mxu0 0
    %410 = vmatprep.subr.bf16.mxu0 0
    %411 = vmatpush1.bf16.msra.mxu0 0
    %412 = vmatprep.mubr.bf16.mxu0 0
    %413 = vmatmul.mubr.bf16.gmra.mrb[0].mxu0 %v325
    %v414 = vpop.f32.mrb[0].mxu0
    %v415 = vadd.f32 %v330, %v414
    %v416 = vpop.f32.mrb[0].mxu0
    %v417 = vpop.f32.mrb[0].mxu0
    %v418 = vpop.f32.mrb[0].mxu0
    %419 = vdwg.mxu0
    %v420 = vpack.c.bf16 %v415, %v415
    %421 = vmatprep.subr.bf16.mxu0 0
    %422 = vmatpush1.bf16.msra.mxu0 %v172
    %423 = vmatprep.subr.bf16.mxu0 0
    %424 = vmatpush1.bf16.msra.mxu0 %v173
    %425 = vmatprep.subr.bf16.mxu0 0
    %426 = vmatpush1.bf16.msra.mxu0 %v174
    %427 = vmatprep.subr.bf16.mxu0 0
    %428 = vmatpush1.bf16.msra.mxu0 %v175
    %429 = vmatprep.subr.bf16.mxu0 0
    %430 = vmatpush1.bf16.msra.mxu0 %v176
    %431 = vmatprep.subr.bf16.mxu0 0
    %432 = vmatpush1.bf16.msra.mxu0 %v177
    %433 = vmatprep.subr.bf16.mxu0 0
    %434 = vmatpush1.bf16.msra.mxu0 %v178
    %435 = vmatprep.subr.bf16.mxu0 0
    %436 = vmatpush1.bf16.msra.mxu0 %v179
    %437 = vmatprep.subr.bf16.mxu0 0
    %438 = vmatpush1.bf16.msra.mxu0 0
    %439 = vmatprep.subr.bf16.mxu0 0
    %440 = vmatpush1.bf16.msra.mxu0 0
    %441 = vmatprep.subr.bf16.mxu0 0
    %442 = vmatpush1.bf16.msra.mxu0 0
    %443 = vmatprep.subr.bf16.mxu0 0
    %444 = vmatpush1.bf16.msra.mxu0 0
    %445 = vmatprep.subr.bf16.mxu0 0
    %446 = vmatpush1.bf16.msra.mxu0 0
    %447 = vmatprep.subr.bf16.mxu0 0
    %448 = vmatpush1.bf16.msra.mxu0 0
    %449 = vmatprep.subr.bf16.mxu0 0
    %450 = vmatpush1.bf16.msra.mxu0 0
    %451 = vmatprep.subr.bf16.mxu0 0
    %452 = vmatpush1.bf16.msra.mxu0 0
    %453 = vmatprep.mubr.bf16.mxu0 0
    %454 = vmatmul.mubr.bf16.gmra.mrb[0].mxu0 %v420
    %v455 = vpop.f32.mrb[0].mxu0
    %v456 = vadd.f32 %v138, %v455
    %v457 = vpop.f32.mrb[0].mxu0
    %v458 = vpop.f32.mrb[0].mxu0
    %v459 = vpop.f32.mrb[0].mxu0
    %460 = vdwg.mxu0
    %v461 = vmax.f32 %v456, 0.0
    %v462 = vpack.c.bf16 %v461, %v461
    %463 = vmatprep.subr.bf16.mxu0 0
    %464 = vmatpush1.bf16.msra.mxu0 %v268
    %465 = vmatprep.subr.bf16.mxu0 0
    %466 = vmatpush1.bf16.msra.mxu0 %v269
    %467 = vmatprep.subr.bf16.mxu0 0
    %468 = vmatpush1.bf16.msra.mxu0 %v270
    %469 = vmatprep.subr.bf16.mxu0 0
    %470 = vmatpush1.bf16.msra.mxu0 %v271
    %471 = vmatprep.subr.bf16.mxu0 0
    %472 = vmatpush1.bf16.msra.mxu0 %v272
    %473 = vmatprep.subr.bf16.mxu0 0
    %474 = vmatpush1.bf16.msra.mxu0 %v273
    %475 = vmatprep.subr.bf16.mxu0 0
    %476 = vmatpush1.bf16.msra.mxu0 %v274
    %477 = vmatprep.subr.bf16.mxu0 0
    %478 = vmatpush1.bf16.msra.mxu0 %v275
    %479 = vmatprep.subr.bf16.mxu0 0
    %480 = vmatpush1.bf16.msra.mxu0 0
    %481 = vmatprep.subr.bf16.mxu0 0
    %482 = vmatpush1.bf16.msra.mxu0 0
    %483 = vmatprep.subr.bf16.mxu0 0
    %484 = vmatpush1.bf16.msra.mxu0 0
    %485 = vmatprep.subr.bf16.mxu0 0
    %486 = vmatpush1.bf16.msra.mxu0 0
    %487 = vmatprep.subr.bf16.mxu0 0
    %488 = vmatpush1.bf16.msra.mxu0 0
    %489 = vmatprep.subr.bf16.mxu0 0
    %490 = vmatpush1.bf16.msra.mxu0 0
    %491 = vmatprep.subr.bf16.mxu0 0
    %492 = vmatpush1.bf16.msra.mxu0 0
    %493 = vmatprep.subr.bf16.mxu0 0
    %494 = vmatpush1.bf16.msra.mxu0 0
    %495 = vmatprep.mubr.bf16.mxu0 0
    %496 = vmatmul.mubr.bf16.gmra.mrb[0].mxu0 %v462
    %v497 = vpop.f32.mrb[0].mxu0
    %v498 = vadd.f32 %v234, %v497
    %v499 = vpop.f32.mrb[0].mxu0
    %v500 = vpop.f32.mrb[0].mxu0
    %v501 = vpop.f32.mrb[0].mxu0
    %502 = vdwg.mxu0
    %v503 = vmax.f32 %v498, 0.0
    %v504 = vpack.c.bf16 %v503, %v503
    %505 = vmatprep.subr.bf16.mxu0 0
    %506 = vmatpush1.bf16.msra.mxu0 %v364
    %507 = vmatprep.subr.bf16.mxu0 0
    %508 = vmatpush1.bf16.msra.mxu0 %v365
    %509 = vmatprep.subr.bf16.mxu0 0
    %510 = vmatpush1.bf16.msra.mxu0 %v366
    %511 = vmatprep.subr.bf16.mxu0 0
    %512 = vmatpush1.bf16.msra.mxu0 %v367
    %513 = vmatprep.subr.bf16.mxu0 0
    %514 = vmatpush1.bf16.msra.mxu0 %v368
    %515 = vmatprep.subr.bf16.mxu0 0
    %516 = vmatpush1.bf16.msra.mxu0 %v369
    %517 = vmatprep.subr.bf16.mxu0 0
    %518 = vmatpush1.bf16.msra.mxu0 %v370
    %519 = vmatprep.subr.bf16.mxu0 0
    %520 = vmatpush1.bf16.msra.mxu0 %v371
    %521 = vmatprep.subr.bf16.mxu0 0
    %522 = vmatpush1.bf16.msra.mxu0 0
    %523 = vmatprep.subr.bf16.mxu0 0
    %524 = vmatpush1.bf16.msra.mxu0 0
    %525 = vmatprep.subr.bf16.mxu0 0
    %526 = vmatpush1.bf16.msra.mxu0 0
    %527 = vmatprep.subr.bf16.mxu0 0
    %528 = vmatpush1.bf16.msra.mxu0 0
    %529 = vmatprep.subr.bf16.mxu0 0
    %530 = vmatpush1.bf16.msra.mxu0 0
    %531 = vmatprep.subr.bf16.mxu0 0
    %532 = vmatpush1.bf16.msra.mxu0 0
    %533 = vmatprep.subr.bf16.mxu0 0
    %534 = vmatpush1.bf16.msra.mxu0 0
    %535 = vmatprep.subr.bf16.mxu0 0
    %536 = vmatpush1.bf16.msra.mxu0 0
    %537 = vmatprep.mubr.bf16.mxu0 0
    %538 = vmatmul.mubr.bf16.gmra.mrb[0].mxu0 %v504
    %v539 = vpop.f32.mrb[0].mxu0
    %v540 = vadd.f32 %v330, %v539
    %v541 = vpop.f32.mrb[0].mxu0
    %v542 = vpop.f32.mrb[0].mxu0
    %v543 = vpop.f32.mrb[0].mxu0
    %544 = vdwg.mxu0
    %v545 = vpack.c.bf16 %v540, %v540
    %546 = vmatprep.subr.bf16.mxu0 0
    %547 = vmatpush1.bf16.msra.mxu0 %v172
    %548 = vmatprep.subr.bf16.mxu0 0
    %549 = vmatpush1.bf16.msra.mxu0 %v173
    %550 = vmatprep.subr.bf16.mxu0 0
    %551 = vmatpush1.bf16.msra.mxu0 %v174
    %552 = vmatprep.subr.bf16.mxu0 0
    %553 = vmatpush1.bf16.msra.mxu0 %v175
    %554 = vmatprep.subr.bf16.mxu0 0
    %555 = vmatpush1.bf16.msra.mxu0 %v176
    %556 = vmatprep.subr.bf16.mxu0 0
    %557 = vmatpush1.bf16.msra.mxu0 %v177
    %558 = vmatprep.subr.bf16.mxu0 0
    %559 = vmatpush1.bf16.msra.mxu0 %v178
    %560 = vmatprep.subr.bf16.mxu0 0
    %561 = vmatpush1.bf16.msra.mxu0 %v179
    %562 = vmatprep.subr.bf16.mxu0 0
    %563 = vmatpush1.bf16.msra.mxu0 0
    %564 = vmatprep.subr.bf16.mxu0 0
    %565 = vmatpush1.bf16.msra.mxu0 0
    %566 = vmatprep.subr.bf16.mxu0 0
    %567 = vmatpush1.bf16.msra.mxu0 0
    %568 = vmatprep.subr.bf16.mxu0 0
    %569 = vmatpush1.bf16.msra.mxu0 0
    %570 = vmatprep.subr.bf16.mxu0 0
    %571 = vmatpush1.bf16.msra.mxu0 0
    %572 = vmatprep.subr.bf16.mxu0 0
    %573 = vmatpush1.bf16.msra.mxu0 0
    %574 = vmatprep.subr.bf16.mxu0 0
    %575 = vmatpush1.bf16.msra.mxu0 0
    %576 = vmatprep.subr.bf16.mxu0 0
    %577 = vmatpush1.bf16.msra.mxu0 0
    %578 = vmatprep.mubr.bf16.mxu0 0
    %579 = vmatmul.mubr.bf16.gmra.mrb[0].mxu0 %v545
    %v580 = vpop.f32.mrb[0].mxu0
    %v581 = vadd.f32 %v138, %v580
    %v582 = vpop.f32.mrb[0].mxu0
    %v583 = vpop.f32.mrb[0].mxu0
    %v584 = vpop.f32.mrb[0].mxu0
    %585 = vdwg.mxu0
    %v586 = vmax.f32 %v581, 0.0
    %v587 = vpack.c.bf16 %v586, %v586
    %588 = vmatprep.subr.bf16.mxu0 0
    %589 = vmatpush1.bf16.msra.mxu0 %v268
    %590 = vmatprep.subr.bf16.mxu0 0
    %591 = vmatpush1.bf16.msra.mxu0 %v269
    %592 = vmatprep.subr.bf16.mxu0 0
    %593 = vmatpush1.bf16.msra.mxu0 %v270
    %594 = vmatprep.subr.bf16.mxu0 0
    %595 = vmatpush1.bf16.msra.mxu0 %v271
    %596 = vmatprep.subr.bf16.mxu0 0
    %597 = vmatpush1.bf16.msra.mxu0 %v272
    %598 = vmatprep.subr.bf16.mxu0 0
    %599 = vmatpush1.bf16.msra.mxu0 %v273
    %600 = vmatprep.subr.bf16.mxu0 0
    %601 = vmatpush1.bf16.msra.mxu0 %v274
    %602 = vmatprep.subr.bf16.mxu0 0
    %603 = vmatpush1.bf16.msra.mxu0 %v275
    %604 = vmatprep.subr.bf16.mxu0 0
    %605 = vmatpush1.bf16.msra.mxu0 0
    %606 = vmatprep.subr.bf16.mxu0 0
    %607 = vmatpush1.bf16.msra.mxu0 0
    %608 = vmatprep.subr.bf16.mxu0 0
    %609 = vmatpush1.bf16.msra.mxu0 0
    %610 = vmatprep.subr.bf16.mxu0 0
    %611 = vmatpush1.bf16.msra.mxu0 0
    %612 = vmatprep.subr.bf16.mxu0 0
    %613 = vmatpush1.bf16.msra.mxu0 0
    %614 = vmatprep.subr.bf16.mxu0 0
    %615 = vmatpush1.bf16.msra.mxu0 0
    %616 = vmatprep.subr.bf16.mxu0 0
    %617 = vmatpush1.bf16.msra.mxu0 0
    %618 = vmatprep.subr.bf16.mxu0 0
    %619 = vmatpush1.bf16.msra.mxu0 0
    %620 = vmatprep.mubr.bf16.mxu0 0
    %621 = vmatmul.mubr.bf16.gmra.mrb[0].mxu0 %v587
    %v622 = vpop.f32.mrb[0].mxu0
    %v623 = vadd.f32 %v234, %v622
    %v624 = vpop.f32.mrb[0].mxu0
    %v625 = vpop.f32.mrb[0].mxu0
    %v626 = vpop.f32.mrb[0].mxu0
    %627 = vdwg.mxu0
    %v628 = vmax.f32 %v623, 0.0
    %v629 = vpack.c.bf16 %v628, %v628
    %630 = vmatprep.subr.bf16.mxu0 0
    %631 = vmatpush1.bf16.msra.mxu0 %v364
    %632 = vmatprep.subr.bf16.mxu0 0
    %633 = vmatpush1.bf16.msra.mxu0 %v365
    %634 = vmatprep.subr.bf16.mxu0 0
    %635 = vmatpush1.bf16.msra.mxu0 %v366
    %636 = vmatprep.subr.bf16.mxu0 0
    %637 = vmatpush1.bf16.msra.mxu0 %v367
    %638 = vmatprep.subr.bf16.mxu0 0
    %639 = vmatpush1.bf16.msra.mxu0 %v368
    %640 = vmatprep.subr.bf16.mxu0 0
    %641 = vmatpush1.bf16.msra.mxu0 %v369
    %642 = vmatprep.subr.bf16.mxu0 0
    %643 = vmatpush1.bf16.msra.mxu0 %v370
    %644 = vmatprep.subr.bf16.mxu0 0
    %645 = vmatpush1.bf16.msra.mxu0 %v371
    %646 = vmatprep.subr.bf16.mxu0 0
    %647 = vmatpush1.bf16.msra.mxu0 0
    %648 = vmatprep.subr.bf16.mxu0 0
    %649 = vmatpush1.bf16.msra.mxu0 0
    %650 = vmatprep.subr.bf16.mxu0 0
    %651 = vmatpush1.bf16.msra.mxu0 0
    %652 = vmatprep.subr.bf16.mxu0 0
    %653 = vmatpush1.bf16.msra.mxu0 0
    %654 = vmatprep.subr.bf16.mxu0 0
    %655 = vmatpush1.bf16.msra.mxu0 0
    %656 = vmatprep.subr.bf16.mxu0 0
    %657 = vmatpush1.bf16.msra.mxu0 0
    %658 = vmatprep.subr.bf16.mxu0 0
    %659 = vmatpush1.bf16.msra.mxu0 0
    %660 = vmatprep.subr.bf16.mxu0 0
    %661 = vmatpush1.bf16.msra.mxu0 0
    %662 = vmatprep.mubr.bf16.mxu0 0
    %663 = vmatmul.mubr.bf16.gmra.mrb[0].mxu0 %v629
    %v664 = vpop.f32.mrb[0].mxu0
    %v665 = vadd.f32 %v330, %v664
    %v666 = vpop.f32.mrb[0].mxu0
    %v667 = vpop.f32.mrb[0].mxu0
    %v668 = vpop.f32.mrb[0].mxu0
    %669 = vdwg.mxu0
    %670 = vst [vmem:[#allocation10] sm:$0xff] %v665
    // Predicated region
    $region46: #{tpu_custom_call.1} parent=1 // pred_check
      _
    $region47: #{tpu_custom_call.1} parent=1 // pred_check_branch
      %672 = sbr.rel (0) target = $region49
    $region48: #{tpu_custom_call.1} parent=1 // pred_region
      %s674 = ssub.s32 128, 128
      %675 = vsyncadd [#allocation4], %s674
      %s677 = sshll.u32 [#allocation10], 4
      %s678 = int_to_ptr.vmem [resolvable:$true] %s677
      %680 = dma.vmem_to_hbm [thread:$0]  %s678, 128, %s7, [#allocation4]
    $region49: #{tpu_custom_call.1} parent=1 // pred_fallthru
      _
    // Predicated region
    $region50: #{tpu_custom_call.1} parent=1 // pred_check
      _
    $region51: #{tpu_custom_call.1} parent=1 // pred_check_branch
      %682 = sbr.rel (0) target = $region53
    $region52: #{tpu_custom_call.1} parent=1 // pred_region
      %683 = dma.done [#allocation4], 128
    $region53: #{tpu_custom_call.1} parent=1 // pred_fallthru
      _
    %684 = vsyncpa [#allocation3], 1
    %685 = vsyncpa [#allocation6], 1
    %686 = vsyncpa [#allocation9], 1
    %687 = vsyncpa [#allocation4], 1

</llo_original>
